<compile_context>
chip_gen: v6e
topology: v6e:2x2x1
jax: 0.10.0
libtpu: 0.0.40
codegen_flags: <defaults>
</compile_context>

<pallas_src>
import functools

import jax
import jax.numpy as jnp
from jax.experimental import pallas as pl
from jax.experimental.pallas import tpu as pltpu

NEG_SLOPE = 0.01  # nn.LeakyReLU default negative_slope


def _leaky_relu(x):
    return jnp.where(x > 0, x, NEG_SLOPE * x)


def _round_up(x, m):
    return (x + m - 1) // m * m


# ---------------------------------------------------------------------------
# Kernels.  The leading batch dim is squeezed by BlockSpec, so refs are 2-D:
#   x_ref : (C_in, T)   tile of pixels, channels-major (T lanes, multiple of 128)
#   o_ref : (C_out, T)
# Weights / biases are resident across the whole grid (full-array BlockSpecs).
# Matmuls take the HBM dtype (f32 or bf16) directly into the MXU and
# accumulate in f32; activation / residual math stays in the f32 accumulator.
# ---------------------------------------------------------------------------

def _kernel_skip_fused(c_out, x_ref, wcat_ref, bcat_ref, w2_ref, b2_ref, o_ref):
    """in_ch != out_ch and C_out % 8 == 0: conv1 + skip fused into one matmul."""
    x = x_ref[...]                                                     # (C_in, T)
    hx = jnp.dot(wcat_ref[...], x, preferred_element_type=jnp.float32) + bcat_ref[...]
    h = _leaky_relu(hx[:c_out])          # conv1 rows (sublane-aligned split)
    ident = hx[c_out:]                   # skip-conv rows
    h = jnp.dot(w2_ref[...], h.astype(w2_ref.dtype),
                preferred_element_type=jnp.float32) + b2_ref[...]
    h = _leaky_relu(h)
    o_ref[...] = (h + ident).astype(o_ref.dtype)


def _kernel_skip_split(x_ref, w1_ref, b1_ref, ws_ref, bs_ref, w2_ref, b2_ref, o_ref):
    """in_ch != out_ch, C_out not a multiple of 8: two dots reuse the loaded x."""
    x = x_ref[...]
    h = jnp.dot(w1_ref[...], x, preferred_element_type=jnp.float32) + b1_ref[...]
    h = _leaky_relu(h)
    ident = jnp.dot(ws_ref[...], x, preferred_element_type=jnp.float32) + bs_ref[...]
    h = jnp.dot(w2_ref[...], h.astype(w2_ref.dtype),
                preferred_element_type=jnp.float32) + b2_ref[...]
    h = _leaky_relu(h)
    o_ref[...] = (h + ident).astype(o_ref.dtype)


def _kernel_identity(x_ref, w1_ref, b1_ref, w2_ref, b2_ref, o_ref):
    """in_ch == out_ch: skip is identity."""
    x = x_ref[...]
    h = jnp.dot(w1_ref[...], x, preferred_element_type=jnp.float32) + b1_ref[...]
    h = _leaky_relu(h)
    h = jnp.dot(w2_ref[...], h.astype(w2_ref.dtype),
                preferred_element_type=jnp.float32) + b2_ref[...]
    h = _leaky_relu(h)
    o_ref[...] = (h + x).astype(o_ref.dtype)


def residual_block_1_1(x_nchw, params, *, use_bf16=False):
    """Forward pass of ResidualBlock_1_1 (stride=1).

    x_nchw : (N, C_in, H, W)
    params : dict with w1 (C_out, C_in), b1 (C_out, 1),
                       w2 (C_out, C_out), b2 (C_out, 1),
                       optionally ws (C_out, C_in), bs (C_out, 1)
    use_bf16 : cast x + matmul weights to bf16 for HBM/MXU (f32 accumulation).
    """
    N, C_in, H, W = x_nchw.shape
    C_out = params["w1"].shape[0]
    hw = H * W

    # HBM dtypes.  Keep the output f32 when C_out < 16: a bf16 (C_out, T)
    # store with < 16 sublanes degrades to packed / masked stores.
    in_dtype = jnp.bfloat16 if use_bf16 else x_nchw.dtype
    out_dtype = jnp.bfloat16 if (use_bf16 and C_out >= 16) else x_nchw.dtype

    # Channels-major, free reshape (no transpose), no padding / slicing.
    x3 = x_nchw.reshape(N, C_in, hw).astype(in_dtype)

    in_bytes = jnp.dtype(in_dtype).itemsize
    out_bytes = jnp.dtype(out_dtype).itemsize

    # Generation-aware VMEM budget (v7x: 64 MiB/TC, v5e/v6e: 128 MiB).
    try:
        vmem_cap = int(pltpu.get_tpu_info().vmem_capacity_bytes)
    except Exception:
        vmem_cap = 0
    if not vmem_cap:
        vmem_cap = 64 << 20  # conservative default (v7x per-TC VMEM)

    # --- spatial tile: sized by bytes-per-grid-step, capped by VMEM ---------
    per_pixel_bytes = C_in * in_bytes + C_out * out_bytes
    target_step_bytes = 2 << 20                      # ~2 MiB of x+out per step
    tile = _round_up(max(128, target_step_bytes // per_pixel_bytes), 128)
    vmem_budget = int(vmem_cap * 0.40)               # double-buffered blocks
    tile_cap = max(128, (vmem_budget // (2 * per_pixel_bytes)) // 128 * 128)
    tile = min(tile, tile_cap, _round_up(hw, 128))
    # v7x megacore: keep >= 2 grid steps when N == 1 so both TCs get work.
    if N == 1 and tile >= _round_up(hw, 128) and hw > 128:
        tile = max(128, _round_up(pl.cdiv(hw, 2), 128))

    grid = (N, pl.cdiv(hw, tile))                    # partial last block is masked

    x_spec = pl.BlockSpec((None, C_in, tile), lambda n, s: (n, 0, s))
    o_spec = pl.BlockSpec((None, C_out, tile), lambda n, s: (n, 0, s))
    full = lambda shape: pl.BlockSpec(shape, lambda n, s: (0, 0))
    # TODO(synk): on v5e, if DMA is still exposed with these tiles, use
    #   pipeline_mode=pl.Buffered(3) on x_spec/o_spec (plenty of VMEM headroom).

    has_skip = "ws" in params
    w1 = params["w1"].astype(in_dtype)
    w2 = params["w2"].astype(in_dtype)
    b1 = params["b1"].astype(jnp.float32)
    b2 = params["b2"].astype(jnp.float32)

    if has_skip and C_out % 8 == 0:
        # conv1 + skip fused into one contraction on x; the f32 result is
        # split at row C_out, which is sublane-aligned (C_out % 8 == 0).
        ws = params["ws"].astype(in_dtype)
        bs = params["bs"].astype(jnp.float32)
        w_cat = jnp.concatenate([w1, ws], axis=0)    # (2*C_out, C_in)
        b_cat = jnp.concatenate([b1, bs], axis=0)    # (2*C_out, 1)
        kernel = functools.partial(_kernel_skip_fused, C_out)
        in_specs = [x_spec,
                    full((2 * C_out, C_in)), full((2 * C_out, 1)),
                    full((C_out, C_out)), full((C_out, 1))]
        args = (x3, w_cat, b_cat, w2, b2)
    elif has_skip:
        # Non-sublane-aligned C_out: two separate dots reuse the loaded x.
        ws = params["ws"].astype(in_dtype)
        bs = params["bs"].astype(jnp.float32)
        kernel = _kernel_skip_split
        in_specs = [x_spec,
                    full((C_out, C_in)), full((C_out, 1)),
                    full((C_out, C_in)), full((C_out, 1)),
                    full((C_out, C_out)), full((C_out, 1))]
        args = (x3, w1, b1, ws, bs, w2, b2)
    else:
        kernel = _kernel_identity
        in_specs = [x_spec,
                    full((C_out, C_in)), full((C_out, 1)),
                    full((C_out, C_out)), full((C_out, 1))]
        args = (x3, w1, b1, w2, b2)

    # Explicit scoped-VMEM limit sized to double-buffered blocks + weights.
    weight_bytes = sum(int(a.size) * a.dtype.itemsize for a in args[1:])
    step_bytes = tile * per_pixel_bytes
    vmem_limit = 2 * step_bytes + 2 * weight_bytes + (4 << 20)
    vmem_limit = int(min(max(vmem_limit, 32 << 20), int(vmem_cap * 0.75)))

    out3 = pl.pallas_call(
        kernel,
        out_shape=jax.ShapeDtypeStruct((N, C_out, hw), out_dtype),
        grid_spec=pltpu.PrefetchScalarGridSpec(
            num_scalar_prefetch=0,
            grid=grid,
            in_specs=in_specs,
            out_specs=o_spec,
        ),
        compiler_params=pltpu.CompilerParams(
            dimension_semantics=("parallel", "parallel"),
            vmem_limit_bytes=vmem_limit),
    )(*args)

    return out3.reshape(N, C_out, H, W)


def init_params(key, in_ch, out_ch):
    """Deterministic synthetic parameters (Conv2d 1x1 == dense over channels)."""
    ks = jax.random.split(key, 6)

    def conv_init(kw, kb, cin, cout):
        bound = (1.0 / cin) ** 0.5  # PyTorch default kaiming-uniform-ish bound
        w = jax.random.uniform(kw, (cout, cin), jnp.float32, -bound, bound)
        b = jax.random.uniform(kb, (cout, 1), jnp.float32, -bound, bound)
        return w, b

    w1, b1 = conv_init(ks[0], ks[1], in_ch, out_ch)
    w2, b2 = conv_init(ks[2], ks[3], out_ch, out_ch)
    params = {"w1": w1, "b1": b1, "w2": w2, "b2": b2}
    if in_ch != out_ch:
        ws, bs = conv_init(ks[4], ks[5], in_ch, out_ch)
        params["ws"] = ws
        params["bs"] = bs
    return params


def reference_forward(x_nchw, params):
    """Pure-JAX reference mirroring the PyTorch forward (f32)."""
    N, C, H, W = x_nchw.shape
    x3 = x_nchw.reshape(N, C, H * W).astype(jnp.float32)

    def conv1x1(w, b, t):  # w: (Co, Ci), t: (N, Ci, P)
        return jnp.einsum("oc,ncp->nop", w, t) + b[None, :, :]

    h = _leaky_relu(conv1x1(params["w1"], params["b1"], x3))
    h = _leaky_relu(conv1x1(params["w2"], params["b2"], h))
    ident = conv1x1(params["ws"], params["bs"], x3) if "ws" in params else x3
    out = h + ident
    C_out = params["w1"].shape[0]
    return out.reshape(N, C_out, H, W).astype(jnp.float32)


if __name__ == "__main__":
    key = jax.random.PRNGKey(0)
    k_x, k_p, k_x2, k_p2, k_x3, k_p3 = jax.random.split(key, 6)

    # Case 1: in_ch != out_ch (fused conv1+skip path), f32.
    N, in_ch, out_ch, H, W = 2, 4, 8, 16, 16
    x = jax.random.normal(k_x, (N, in_ch, H, W), dtype=jnp.float32)
    params = init_params(k_p, in_ch, out_ch)
    out = jax.block_until_ready(residual_block_1_1(x, params))
    ref = reference_forward(x, params)
    assert out.shape == (N, out_ch, H, W)
    assert jnp.allclose(out, ref, atol=1e-5, rtol=1e-5), "skip-path mismatch vs reference"

    # Case 2: in_ch == out_ch (identity-skip path), f32.
    x2 = jax.random.normal(k_x2, (N, out_ch, H, W), dtype=jnp.float32)
    params2 = init_params(k_p2, out_ch, out_ch)
    out2 = jax.block_until_ready(residual_block_1_1(x2, params2))
    ref2 = reference_forward(x2, params2)
    assert jnp.allclose(out2, ref2, atol=1e-5, rtol=1e-5), "identity-path mismatch vs reference"

    # Case 3: N=1 with hw not a multiple of the tile (exercises the masked
    # partial last block and the v7x >=2-tiles-per-batch rule).
    H3 = W3 = 13
    x3 = jax.random.normal(k_x3, (1, out_ch, H3, W3), dtype=jnp.float32)
    params3 = init_params(k_p3, out_ch, out_ch)
    out3 = jax.block_until_ready(residual_block_1_1(x3, params3))
    ref3 = reference_forward(x3, params3)
    assert out3.shape == (1, out_ch, H3, W3)
    assert jnp.allclose(out3, ref3, atol=1e-5, rtol=1e-5), "partial-block mismatch vs reference"

    # Case 4: bf16 HBM path (f32 accumulation; output stays f32 since C_out<16).
    out4 = jax.block_until_ready(residual_block_1_1(x, params, use_bf16=True))
    assert jnp.allclose(out4.astype(jnp.float32), ref, atol=5e-2, rtol=5e-2), \
        "bf16-path mismatch vs reference"

    print("KERNEL_OK")
</pallas_src>

<mosaic_0001>
module attributes {stable_mosaic.version = 11 : i64} {
  func.func @_kernel_skip_fused(%arg0: i32, %arg1: i32, %arg2: memref<1x4x256xf32, #tpu.memory_space<vmem>>, %arg3: memref<16x4xf32, #tpu.memory_space<vmem>>, %arg4: memref<16x1xf32, #tpu.memory_space<vmem>>, %arg5: memref<8x8xf32, #tpu.memory_space<vmem>>, %arg6: memref<8x1xf32, #tpu.memory_space<vmem>>, %arg7: memref<1x8x256xf32, #tpu.memory_space<vmem>>) attributes {dimension_semantics = [#tpu.dimension_semantics<parallel>, #tpu.dimension_semantics<parallel>], iteration_bounds = array<i64: 2, 1>, scalar_prefetch = 0 : i64, scratch_operands = 0 : i64, tpu.core_type = #tpu.core_type<tc>, window_params = [{transform_indices = @transform_0, window_bounds = array<i64: 1, 4, 256>}, {pipeline_mode = #tpu.pipeline_mode<synchronous>, transform_indices = @transform_1, window_bounds = array<i64: 16, 4>}, {pipeline_mode = #tpu.pipeline_mode<synchronous>, transform_indices = @transform_2, window_bounds = array<i64: 16, 1>}, {pipeline_mode = #tpu.pipeline_mode<synchronous>, transform_indices = @transform_3, window_bounds = array<i64: 8, 8>}, {pipeline_mode = #tpu.pipeline_mode<synchronous>, transform_indices = @transform_4, window_bounds = array<i64: 8, 1>}, {transform_indices = @transform_5, window_bounds = array<i64: 1, 8, 256>}]} {
    %c0 = arith.constant 0 : index
    %c0_0 = arith.constant 0 : index
    %c0_1 = arith.constant 0 : index
    %0 = vector.load %arg2[%c0, %c0_0, %c0_1] : memref<1x4x256xf32, #tpu.memory_space<vmem>>, vector<1x4x256xf32>
    %1 = vector.shape_cast %0 : vector<1x4x256xf32> to vector<4x256xf32>
    %c0_2 = arith.constant 0 : index
    %c0_3 = arith.constant 0 : index
    %2 = vector.load %arg3[%c0_2, %c0_3] : memref<16x4xf32, #tpu.memory_space<vmem>>, vector<16x4xf32>
    %cst = arith.constant dense<0.000000e+00> : vector<16x256xf32>
    %3 = tpu.matmul %2, %1, %cst {dimension_numbers = #tpu.dot_dimension_numbers<[1], [0], [0], [1], [0, 0, 1, 1], [], []>} : vector<16x4xf32>, vector<4x256xf32>, vector<16x256xf32> -> vector<16x256xf32>
    %c0_4 = arith.constant 0 : index
    %c0_5 = arith.constant 0 : index
    %4 = vector.load %arg4[%c0_4, %c0_5] : memref<16x1xf32, #tpu.memory_space<vmem>>, vector<16x1xf32>
    %5 = vector.broadcast %4 : vector<16x1xf32> to vector<16x256xf32>
    %6 = arith.addf %3, %5 : vector<16x256xf32>
    %7 = vector.extract_strided_slice %6 {offsets = [0, 0], sizes = [8, 256], strides = [1, 1]} : vector<16x256xf32> to vector<8x256xf32>
    %cst_6 = arith.constant 0.000000e+00 : f32
    %8 = vector.broadcast %cst_6 : f32 to vector<8x256xf32>
    %9 = arith.cmpf ogt, %7, %8 : vector<8x256xf32>
    %cst_7 = arith.constant 0.00999999977 : f32
    %10 = vector.broadcast %cst_7 : f32 to vector<8x256xf32>
    %11 = arith.mulf %10, %7 : vector<8x256xf32>
    %12 = arith.select %9, %7, %11 : vector<8x256xi1>, vector<8x256xf32>
    %13 = vector.extract_strided_slice %6 {offsets = [8, 0], sizes = [8, 256], strides = [1, 1]} : vector<16x256xf32> to vector<8x256xf32>
    %c0_8 = arith.constant 0 : index
    %c0_9 = arith.constant 0 : index
    %14 = vector.load %arg5[%c0_8, %c0_9] : memref<8x8xf32, #tpu.memory_space<vmem>>, vector<8x8xf32>
    %cst_10 = arith.constant dense<0.000000e+00> : vector<8x256xf32>
    %15 = tpu.matmul %14, %12, %cst_10 {dimension_numbers = #tpu.dot_dimension_numbers<[1], [0], [0], [1], [0, 0, 1, 1], [], []>} : vector<8x8xf32>, vector<8x256xf32>, vector<8x256xf32> -> vector<8x256xf32>
    %c0_11 = arith.constant 0 : index
    %c0_12 = arith.constant 0 : index
    %16 = vector.load %arg6[%c0_11, %c0_12] : memref<8x1xf32, #tpu.memory_space<vmem>>, vector<8x1xf32>
    %17 = vector.broadcast %16 : vector<8x1xf32> to vector<8x256xf32>
    %18 = arith.addf %15, %17 : vector<8x256xf32>
    %cst_13 = arith.constant 0.000000e+00 : f32
    %19 = vector.broadcast %cst_13 : f32 to vector<8x256xf32>
    %20 = arith.cmpf ogt, %18, %19 : vector<8x256xf32>
    %cst_14 = arith.constant 0.00999999977 : f32
    %21 = vector.broadcast %cst_14 : f32 to vector<8x256xf32>
    %22 = arith.mulf %21, %18 : vector<8x256xf32>
    %23 = arith.select %20, %18, %22 : vector<8x256xi1>, vector<8x256xf32>
    %24 = arith.addf %23, %13 : vector<8x256xf32>
    %c0_15 = arith.constant 0 : index
    %c0_16 = arith.constant 0 : index
    %c0_17 = arith.constant 0 : index
    %25 = vector.load %arg7[%c0_15, %c0_16, %c0_17] : memref<1x8x256xf32, #tpu.memory_space<vmem>>, vector<1x8x256xf32>
    %26 = vector.shape_cast %25 : vector<1x8x256xf32> to vector<8x256xf32>
    %27 = vector.shape_cast %24 : vector<8x256xf32> to vector<1x8x256xf32>
    tpu.vector_store %arg7[%c0_15, %c0_16, %c0_17], %27 {strides = array<i32>} : memref<1x8x256xf32, #tpu.memory_space<vmem>>, vector<1x8x256xf32>,
    return
  }
  func.func @transform_0(%arg0: i32, %arg1: i32) -> (i32, i32, i32) {
    %c0_i32 = arith.constant 0 : i32
    %c0_i32_0 = arith.constant 0 : i32
    return %arg0, %c0_i32, %arg1 : i32, i32, i32
  }
  func.func @transform_1(%arg0: i32, %arg1: i32) -> (i32, i32) {
    %c0_i32 = arith.constant 0 : i32
    %c0_i32_0 = arith.constant 0 : i32
    %c0_i32_1 = arith.constant 0 : i32
    return %c0_i32, %c0_i32_0 : i32, i32
  }
  func.func @transform_2(%arg0: i32, %arg1: i32) -> (i32, i32) {
    %c0_i32 = arith.constant 0 : i32
    %c0_i32_0 = arith.constant 0 : i32
    %c0_i32_1 = arith.constant 0 : i32
    return %c0_i32, %c0_i32_0 : i32, i32
  }
  func.func @transform_3(%arg0: i32, %arg1: i32) -> (i32, i32) {
    %c0_i32 = arith.constant 0 : i32
    %c0_i32_0 = arith.constant 0 : i32
    %c0_i32_1 = arith.constant 0 : i32
    return %c0_i32, %c0_i32_0 : i32, i32
  }
  func.func @transform_4(%arg0: i32, %arg1: i32) -> (i32, i32) {
    %c0_i32 = arith.constant 0 : i32
    %c0_i32_0 = arith.constant 0 : i32
    %c0_i32_1 = arith.constant 0 : i32
    return %c0_i32, %c0_i32_0 : i32, i32
  }
  func.func @transform_5(%arg0: i32, %arg1: i32) -> (i32, i32, i32) {
    %c0_i32 = arith.constant 0 : i32
    %c0_i32_0 = arith.constant 0 : i32
    return %arg0, %c0_i32, %arg1 : i32, i32, i32
  }
}

</mosaic_0001>

<llo_original>
// kernel: tpu_custom_call.1
$region0: #{tpu_custom_call.1}
  #allocation0 [shape = 'u32[]', space=smem, size = 0x4, offset = 0x4, fixed_abs, tag = 'smem constant byte address 0x4 - core index']
  #allocation1 [shape = 'u32[144,128]{1,0:T(1,128)}', space=vmem, size = 0x12000, scoped, tag = 'internal scratch']
  %s0 = inlined_call_operand.vmem [shape: f32[2,4,256], index: 0, kind: input, shape index: {}]
  %s1 = inlined_call_operand.vmem [shape: f32[16,4], index: 1, kind: input, shape index: {}]
  %s2 = inlined_call_operand.vmem [shape: f32[16,1], index: 2, kind: input, shape index: {}]
  %s3 = inlined_call_operand.vmem [shape: f32[8,8], index: 3, kind: input, shape index: {}]
  %s4 = inlined_call_operand.vmem [shape: f32[8,1], index: 4, kind: input, shape index: {}]
  %s5 = inlined_call_operand.hbm [shape: f32[2,8,256], index: 5, kind: output, shape index: {}]
  %s6 = sld [smem:[#allocation0]]
  $region53: #{tpu_custom_call.1} parent=0
    _
  %s8 = ssub.s32 1, %s6
  %s9 = scalar_select 0, %s8, %s6
  $region1: #{tpu_custom_call.1} parent=0
    #allocation2 [shape = 'u8[16384]{0}', space=vmem, size = 0x4000, scoped, tag = 'output window, operand 0']
    #allocation3 [shape = 's32[2]{0}', space=sflag, size = 0x8, scoped, tag = 'scoped memory for tpu_custom_call.1']
    %10 = vsyncpa [#allocation3], 0
    %s11 = scalar_lea.sflag [#allocation3], 1
    %12 = vsyncpa %s11, 0
    loop: start=0, step=1, limit=4
    $region2: #{tpu_custom_call.1} parent=1 // loop_pre_header
      _
    $region3: #{tpu_custom_call.1} parent=1 // loop_header
      %s14 = sphi 0, %s18
      %p15 = scmp.ge.s32.totalorder %s14, 4
      %s21 = sphi 0, %s33
      %s22 = sphi 0, %s29
      %s23 = sphi 0, %s21
      %s24 = sphi 0, %s22
      %s25 = sphi 0, %s23
      %s26 = sphi 0, %s24
      %s38 = sphi 0, %s40
      %s41 = sphi 0, %s38
      %s42 = sphi 0, %s41
      %s58 = sphi 0, %s42
      %s62 = sphi 0, %s62
      %s64 = sphi 0, %s62
      %s65 = sphi 0, %s64
      %s79 = sphi 0, %s65
      %s83 = sphi 0, %s83
      %s85 = sphi 0, %s83
      %s86 = sphi 0, %s85
      %s100 = sphi 0, %s86
      %s104 = sphi 0, %s104
      %s106 = sphi 0, %s104
      %s107 = sphi 0, %s106
      %s121 = sphi 0, %s107
      %s125 = sphi 0, %s125
      %s127 = sphi 0, %s125
      %s128 = sphi 0, %s127
      %s142 = sphi 0, %s128
      %s150 = sphi 0, %s152
      %s153 = sphi 0, %s150
      %s154 = sphi 0, %s153
      %s170 = sphi 0, %s154
    $region4: #{tpu_custom_call.1} parent=1 // loop_header_branch
      %17 = sbr.rel (%p15) target = $region8
    $region5: #{tpu_custom_call.1} parent=1 // loop_body
      %s19 = ssub.s32 %s14, 1
      %s20 = ssub.s32 %s14, 2
      %s27 = sadd.s32 1, %s22
      %p28 = scmp.ge.s32.totalorder %s27, 1
      %s29 = scalar_select %p28, 0, %s27
      %s30 = sadd.s32 1, %s21
      %s31 = scalar_select %p28, %s30, %s21
      %p32 = scmp.ge.s32.totalorder %s31, 2
      %s33 = scalar_select %p32, 0, %s31
      %s34 = ssub.s32 %s21, %s33
      %s35 = ssub.s32 %s22, %s29
      %s36 = sor.u32 %s34, %s35
      %p37 = scmp.eq.s32.totalorder %s36, 0
      %s39 = sadd.s32 %s38, 1
      %s40 = scalar_select %p37, %s38, %s39
      %p43 = pneg %p37
      %p44 = scmp.eq.s32.totalorder %s14, 1
      %p45 = por %p43, %p44
      %p46 = scmp.ne.s32.totalorder %s38, %s41
      %p47 = scmp.eq.s32.totalorder %s14, 0
      %p48 = por %p46, %p47
      %p49 = scmp.ne.s32.totalorder %s38, %s41
      %p50 = scmp.eq.s32.totalorder %s19, 1
      %p51 = por %p49, %p50
      %p52 = scmp.ne.s32.totalorder %s41, %s42
      %p53 = scmp.eq.s32.totalorder %s19, 0
      %p54 = por %p52, %p53
      %p55 = scmp.ne.s32.totalorder %s41, %s42
      %p56 = scmp.eq.s32.totalorder %s20, 1
      %p57 = por %p55, %p56
      %p59 = scmp.ne.s32.totalorder %s42, %s58
      %p60 = scmp.eq.s32.totalorder %s20, 0
      %p61 = por %p59, %p60
      %s63 = sadd.s32 %s62, 1
      %p66 = scmp.eq.s32.totalorder %s14, 1
      %p67 = scmp.ne.s32.totalorder %s62, %s64
      %p68 = scmp.eq.s32.totalorder %s14, 0
      %p69 = por %p67, %p68
      %p70 = scmp.ne.s32.totalorder %s62, %s64
      %p71 = scmp.eq.s32.totalorder %s19, 1
      %p72 = por %p70, %p71
      %p73 = scmp.ne.s32.totalorder %s64, %s65
      %p74 = scmp.eq.s32.totalorder %s19, 0
      %p75 = por %p73, %p74
      %p76 = scmp.ne.s32.totalorder %s64, %s65
      %p77 = scmp.eq.s32.totalorder %s20, 1
      %p78 = por %p76, %p77
      %p80 = scmp.ne.s32.totalorder %s65, %s79
      %p81 = scmp.eq.s32.totalorder %s20, 0
      %p82 = por %p80, %p81
      %s84 = sadd.s32 %s83, 1
      %p87 = scmp.eq.s32.totalorder %s14, 1
      %p88 = scmp.ne.s32.totalorder %s83, %s85
      %p89 = scmp.eq.s32.totalorder %s14, 0
      %p90 = por %p88, %p89
      %p91 = scmp.ne.s32.totalorder %s83, %s85
      %p92 = scmp.eq.s32.totalorder %s19, 1
      %p93 = por %p91, %p92
      %p94 = scmp.ne.s32.totalorder %s85, %s86
      %p95 = scmp.eq.s32.totalorder %s19, 0
      %p96 = por %p94, %p95
      %p97 = scmp.ne.s32.totalorder %s85, %s86
      %p98 = scmp.eq.s32.totalorder %s20, 1
      %p99 = por %p97, %p98
      %p101 = scmp.ne.s32.totalorder %s86, %s100
      %p102 = scmp.eq.s32.totalorder %s20, 0
      %p103 = por %p101, %p102
      %s105 = sadd.s32 %s104, 1
      %p108 = scmp.eq.s32.totalorder %s14, 1
      %p109 = scmp.ne.s32.totalorder %s104, %s106
      %p110 = scmp.eq.s32.totalorder %s14, 0
      %p111 = por %p109, %p110
      %p112 = scmp.ne.s32.totalorder %s104, %s106
      %p113 = scmp.eq.s32.totalorder %s19, 1
      %p114 = por %p112, %p113
      %p115 = scmp.ne.s32.totalorder %s106, %s107
      %p116 = scmp.eq.s32.totalorder %s19, 0
      %p117 = por %p115, %p116
      %p118 = scmp.ne.s32.totalorder %s106, %s107
      %p119 = scmp.eq.s32.totalorder %s20, 1
      %p120 = por %p118, %p119
      %p122 = scmp.ne.s32.totalorder %s107, %s121
      %p123 = scmp.eq.s32.totalorder %s20, 0
      %p124 = por %p122, %p123
      %s126 = sadd.s32 %s125, 1
      %p129 = scmp.eq.s32.totalorder %s14, 1
      %p130 = scmp.ne.s32.totalorder %s125, %s127
      %p131 = scmp.eq.s32.totalorder %s14, 0
      %p132 = por %p130, %p131
      %p133 = scmp.ne.s32.totalorder %s125, %s127
      %p134 = scmp.eq.s32.totalorder %s19, 1
      %p135 = por %p133, %p134
      %p136 = scmp.ne.s32.totalorder %s127, %s128
      %p137 = scmp.eq.s32.totalorder %s19, 0
      %p138 = por %p136, %p137
      %p139 = scmp.ne.s32.totalorder %s127, %s128
      %p140 = scmp.eq.s32.totalorder %s20, 1
      %p141 = por %p139, %p140
      %p143 = scmp.ne.s32.totalorder %s128, %s142
      %p144 = scmp.eq.s32.totalorder %s20, 0
      %p145 = por %p143, %p144
      %s146 = ssub.s32 %s21, %s33
      %s147 = ssub.s32 %s22, %s29
      %s148 = sor.u32 %s146, %s147
      %p149 = scmp.eq.s32.totalorder %s148, 0
      %s151 = sadd.s32 %s150, 1
      %s152 = scalar_select %p149, %s150, %s151
      %p155 = pneg %p149
      %p156 = scmp.eq.s32.totalorder %s14, 1
      %p157 = por %p155, %p156
      %p158 = scmp.ne.s32.totalorder %s150, %s153
      %p159 = scmp.eq.s32.totalorder %s14, 0
      %p160 = por %p158, %p159
      %p161 = scmp.ne.s32.totalorder %s150, %s153
      %p162 = scmp.eq.s32.totalorder %s19, 1
      %p163 = por %p161, %p162
      %p164 = scmp.ne.s32.totalorder %s153, %s154
      %p165 = scmp.eq.s32.totalorder %s19, 0
      %p166 = por %p164, %p165
      %p167 = scmp.ne.s32.totalorder %s153, %s154
      %p168 = scmp.eq.s32.totalorder %s20, 1
      %p169 = por %p167, %p168
      %p171 = scmp.ne.s32.totalorder %s154, %s170
      %p172 = scmp.eq.s32.totalorder %s20, 0
      %p173 = por %p171, %p172
      %p174 = scmp.le.s32.totalorder 1, %s14
      %p175 = scmp.lt.s32.totalorder %s14, 3
      %p176 = pnand %p174, %p175
      %p177 = pneg %p176
      // Predicated region
      $region9: #{tpu_custom_call.1} parent=5 // pred_check
        _
      $region10: #{tpu_custom_call.1} parent=5 // pred_check_branch
        %179 = sbr.rel (%p176) target = $region12
      $region11: #{tpu_custom_call.1} parent=5 // pred_region
        %s180 = ssub.s32 %s14, 1
        // Predicated region
        $region13: #{tpu_custom_call.1} parent=11 // pred_check
          %p181 = pneg %p75
        $region14: #{tpu_custom_call.1} parent=11 // pred_check_branch
          %183 = sbr.rel (%p181) target = $region16
        $region15: #{tpu_custom_call.1} parent=11 // pred_region
          _
        $region16: #{tpu_custom_call.1} parent=11 // pred_fallthru
          _
        // Predicated region
        $region17: #{tpu_custom_call.1} parent=11 // pred_check
          %p184 = pneg %p96
        $region18: #{tpu_custom_call.1} parent=11 // pred_check_branch
          %186 = sbr.rel (%p184) target = $region20
        $region19: #{tpu_custom_call.1} parent=11 // pred_region
          _
        $region20: #{tpu_custom_call.1} parent=11 // pred_fallthru
          _
        // Predicated region
        $region21: #{tpu_custom_call.1} parent=11 // pred_check
          %p187 = pneg %p117
        $region22: #{tpu_custom_call.1} parent=11 // pred_check_branch
          %189 = sbr.rel (%p187) target = $region24
        $region23: #{tpu_custom_call.1} parent=11 // pred_region
          _
        $region24: #{tpu_custom_call.1} parent=11 // pred_fallthru
          _
        // Predicated region
        $region25: #{tpu_custom_call.1} parent=11 // pred_check
          %p190 = pneg %p138
        $region26: #{tpu_custom_call.1} parent=11 // pred_check_branch
          %192 = sbr.rel (%p190) target = $region28
        $region27: #{tpu_custom_call.1} parent=11 // pred_region
          _
        $region28: #{tpu_custom_call.1} parent=11 // pred_fallthru
          _
      $region12: #{tpu_custom_call.1} parent=5 // pred_fallthru
        _
      %p193 = scmp.lt.s32.totalorder %s14, 2
      // Predicated region
      $region29: #{tpu_custom_call.1} parent=5 // pred_check
        %p194 = pneg %p193
      $region30: #{tpu_custom_call.1} parent=5 // pred_check_branch
        %196 = sbr.rel (%p194) target = $region32
      $region31: #{tpu_custom_call.1} parent=5 // pred_region
        // Predicated region
        $region33: #{tpu_custom_call.1} parent=31 // pred_check
          %p197 = pneg %p48
        $region34: #{tpu_custom_call.1} parent=31 // pred_check_branch
          %199 = sbr.rel (%p197) target = $region36
        $region35: #{tpu_custom_call.1} parent=31 // pred_region
          %s200 = smul.u32 2, %s22
          %p201 = scmp.lt.s32.totalorder %s21, 1
          %s202 = scalar_select %p201, %s21, 1
          %p203 = scmp.lt.s32.totalorder %s200, 1
          %s204 = scalar_select %p203, %s200, 1
          %s205 = smul.addr %s202, 2
          %s206 = sadd.s32 %s204, %s205
          %s207 = smul.addr %s206, 4
          %s208 = scalar_lea.vmem %s0, %s207
          %s209 = smul.u32 2, %s22
        $region36: #{tpu_custom_call.1} parent=31 // pred_fallthru
          _
      $region32: #{tpu_custom_call.1} parent=5 // pred_fallthru
        _
      %p210 = scmp.le.s32.totalorder 1, %s14
      %p211 = scmp.lt.s32.totalorder %s14, 3
      %p212 = pnand %p210, %p211
      %p213 = pneg %p212
      // Predicated region
      $region37: #{tpu_custom_call.1} parent=5 // pred_check
        _
      $region38: #{tpu_custom_call.1} parent=5 // pred_check_branch
        %215 = sbr.rel (%p212) target = $region40
      $region39: #{tpu_custom_call.1} parent=5 // pred_region
        %s216 = ssub.s32 %s14, 1
        %s217 = smul.u32 2, %s24
        %p218 = scmp.lt.s32.totalorder %s23, 1
        %s219 = scalar_select %p218, %s23, 1
        %p220 = scmp.lt.s32.totalorder %s217, 1
        %s221 = scalar_select %p220, %s217, 1
        %s222 = smul.addr %s219, 2
        %s223 = sadd.s32 %s221, %s222
        %s224 = smul.addr %s223, 4
        %s225 = scalar_lea.vmem %s0, %s224
        %p226 = pneg %p54
        %p227 = pneg %p51
        %p228 = pneg %p75
        %p229 = pneg %p72
        %p230 = pneg %p96
        %p231 = pneg %p93
        %p232 = pneg %p117
        %p233 = pneg %p114
        %p234 = pneg %p138
        %p235 = pneg %p135
        %p236 = pneg %p166
        %p237 = pneg %p163
        %s238 = sand.u32 %s153, 1
        %s239 = scalar_lea.sflag [#allocation3], %s238
        %s240 = sand.u32 %s153, 1
        %s241 = smul.addr %s240, 16
        %s242 = scalar_lea.vmem [#allocation2], %s241
        %s243 = smul.u32 2, %s24
        %p244 = scmp.lt.s32.totalorder %s23, 1
        %s245 = scalar_select %p244, %s23, 1
        %p246 = scmp.lt.s32.totalorder %s243, 1
        %s247 = scalar_select %p246, %s243, 1
        %s248 = smul.addr %s245, 2
        %s249 = sadd.s32 %s247, %s248
        %s250 = smul.addr %s249, 4
        %s251 = scalar_lea.vmem %s0, %s250
        %s252 = smul.u32 2, %s24
        %s253 = smul.u32 2, %s24
        %v254 = vld [vmem:[%s251] sm:$0xff]
        %v255 = vld [vmem:[%s1] sm:$0xff]
        %v256 = vld [vmem:[%s1 + $0x8] sm:$0xff]
        %v257 = vld [vmem:[%s2] sm:$0xff]
        %v258 = vld [vmem:[%s2 + $0x8] sm:$0xff]
        %260 = vset.pattern.permute.xlu0 0
        %261 = vperm.xlu0 %260, %v257
        %v262 = vpop.permute.xlu0 %261
        %265 = vset.pattern.permute.xlu0 0
        %266 = vperm.xlu0 %265, %v258
        %v267 = vpop.permute.xlu0 %266
        %v270 = vcombine.high %v254, %v254
        %vm271 = vcmask 31744
        %v273 = vsel %vm271, %v255, 0
        %v276 = vsel %vm271, %v256, 0
        %vm278 = vcmask 1043456
        %v279 = vsel %vm278, %v254, 0
        %v281 = vsel %vm278, %v270, 0
        %283 = vmatprep.subr.mxu0 0.0
        %284 = vmatpush1.msra.mxu0 0.0
        %285 = vmatprep.subr.mxu0 0.0
        %286 = vmatpush1.msra.mxu0 0.0
        %287 = vmatprep.subr.mxu0 0.0
        %288 = vmatpush1.msra.mxu0 0.0
        %289 = vmatprep.subr.mxu0 0.0
        %290 = vmatpush1.msra.mxu0 0.0
        %291 = vmatprep.subr.mxu0 0.0
        %292 = vmatpush1.msra.mxu0 0.0
        %293 = vmatprep.subr.mxu0 0.0
        %294 = vmatpush1.msra.mxu0 0.0
        %295 = vmatprep.subr.mxu0 0.0
        %296 = vmatpush1.msra.mxu0 0.0
        %297 = vmatprep.subr.mxu0 0.0
        %298 = vmatpush1.msra.mxu0 0.0
        %299 = vmatprep.subr.mxu0 0.0
        %300 = vmatpush1.msra.mxu0 0.0
        %301 = vmatprep.subr.mxu0 0.0
        %302 = vmatpush1.msra.mxu0 0.0
        %303 = vmatprep.subr.mxu0 0.0
        %304 = vmatpush1.msra.mxu0 0.0
        %305 = vmatprep.subr.mxu0 0.0
        %306 = vmatpush1.msra.mxu0 0.0
        %307 = vmatprep.subr.mxu0 0.0
        %308 = vmatpush1.msra.mxu0 0.0
        %309 = vmatprep.subr.mxu0 0.0
        %310 = vmatpush1.msra.mxu0 0.0
        %311 = vmatprep.subr.mxu0 0.0
        %312 = vmatpush1.msra.mxu0 0.0
        %313 = vmatprep.subr.mxu0 %v281
        %314 = vmatpush1.msra.mxu0 %v279
        %315 = vmatprep.subr.mxu0 0.0
        %316 = vmatpush2.msra.mxu0 0.0
        %317 = vmatprep.subr.mxu0 0.0
        %318 = vmatpush2.msra.mxu0 0.0
        %319 = vmatprep.subr.mxu0 0.0
        %320 = vmatpush2.msra.mxu0 0.0
        %321 = vmatprep.subr.mxu0 0.0
        %322 = vmatpush2.msra.mxu0 0.0
        %323 = vmatprep.subr.mxu0 0.0
        %324 = vmatpush2.msra.mxu0 0.0
        %325 = vmatprep.subr.mxu0 0.0
        %326 = vmatpush2.msra.mxu0 0.0
        %327 = vmatprep.subr.mxu0 0.0
        %328 = vmatpush2.msra.mxu0 0.0
        %329 = vmatprep.subr.mxu0 0.0
        %330 = vmatpush2.msra.mxu0 0.0
        %331 = vmatprep.subr.mxu0 0.0
        %332 = vmatpush2.msra.mxu0 0.0
        %333 = vmatprep.subr.mxu0 0.0
        %334 = vmatpush2.msra.mxu0 0.0
        %335 = vmatprep.subr.mxu0 0.0
        %336 = vmatpush2.msra.mxu0 0.0
        %337 = vmatprep.subr.mxu0 0.0
        %338 = vmatpush2.msra.mxu0 0.0
        %339 = vmatprep.subr.mxu0 0.0
        %340 = vmatpush2.msra.mxu0 0.0
        %341 = vmatprep.subr.mxu0 0.0
        %342 = vmatpush2.msra.mxu0 0.0
        %343 = vmatprep.subr.mxu0 0.0
        %344 = vmatpush2.msra.mxu0 0.0
        %345 = vmatprep.subr.mxu0 0.0
        %346 = vmatpush2.msra.mxu0 0.0
        %347 = vmatprep.mubr.f32.mxu0 0.0
        %348 = vmatmul.mubr.f32.gmra.mxu0 %v273
        %v349 = vpop.f32.mrf.mxu0
        %v350 = vadd.f32 %v262, %v349
        %v351 = vpop.f32.mrf.mxu0
        %v352 = vadd.f32 %v262, %v351
        %353 = vmatprep.mubr.f32.mxu0 0.0
        %354 = vmatmul.mubr.f32.gmra.mxu0 %v276
        %v355 = vpop.f32.mrf.mxu0
        %v356 = vadd.f32 %v267, %v355
        %v357 = vpop.f32.mrf.mxu0
        %v358 = vadd.f32 %v267, %v357
        %359 = vdwg.mxu0
        %vm360 = vcmp.gt.f32.partialorder %v350, 0.0
        %vm361 = vcmp.gt.f32.partialorder %v352, 0.0
        %v362 = vmul.f32 %v350, 0.01
        %v363 = vmul.f32 %v352, 0.01
        %v364 = vsel %vm360, %v350, %v362
        %v365 = vsel %vm361, %v352, %v363
        %v366 = vld [vmem:[%s3] sm:$0xff]
        %v367 = vld [vmem:[%s4] sm:$0xff]
        %369 = vset.pattern.permute.xlu0 0
        %370 = vperm.xlu0 %369, %v367
        %v371 = vpop.permute.xlu0 %370
        %vm373 = vcmask 64512
        %v375 = vsel %vm373, %v366, 0
        %377 = vmatprep.subr.mxu0 0.0
        %378 = vmatpush1.msra.mxu0 0.0
        %379 = vmatprep.subr.mxu0 0.0
        %380 = vmatpush1.msra.mxu0 0.0
        %381 = vmatprep.subr.mxu0 0.0
        %382 = vmatpush1.msra.mxu0 0.0
        %383 = vmatprep.subr.mxu0 0.0
        %384 = vmatpush1.msra.mxu0 0.0
        %385 = vmatprep.subr.mxu0 0.0
        %386 = vmatpush1.msra.mxu0 0.0
        %387 = vmatprep.subr.mxu0 0.0
        %388 = vmatpush1.msra.mxu0 0.0
        %389 = vmatprep.subr.mxu0 0.0
        %390 = vmatpush1.msra.mxu0 0.0
        %391 = vmatprep.subr.mxu0 0.0
        %392 = vmatpush1.msra.mxu0 0.0
        %393 = vmatprep.subr.mxu0 0.0
        %394 = vmatpush1.msra.mxu0 0.0
        %395 = vmatprep.subr.mxu0 0.0
        %396 = vmatpush1.msra.mxu0 0.0
        %397 = vmatprep.subr.mxu0 0.0
        %398 = vmatpush1.msra.mxu0 0.0
        %399 = vmatprep.subr.mxu0 0.0
        %400 = vmatpush1.msra.mxu0 0.0
        %401 = vmatprep.subr.mxu0 0.0
        %402 = vmatpush1.msra.mxu0 0.0
        %403 = vmatprep.subr.mxu0 0.0
        %404 = vmatpush1.msra.mxu0 0.0
        %405 = vmatprep.subr.mxu0 0.0
        %406 = vmatpush1.msra.mxu0 0.0
        %407 = vmatprep.subr.mxu0 %v365
        %408 = vmatpush1.msra.mxu0 %v364
        %409 = vmatprep.subr.mxu0 0.0
        %410 = vmatpush2.msra.mxu0 0.0
        %411 = vmatprep.subr.mxu0 0.0
        %412 = vmatpush2.msra.mxu0 0.0
        %413 = vmatprep.subr.mxu0 0.0
        %414 = vmatpush2.msra.mxu0 0.0
        %415 = vmatprep.subr.mxu0 0.0
        %416 = vmatpush2.msra.mxu0 0.0
        %417 = vmatprep.subr.mxu0 0.0
        %418 = vmatpush2.msra.mxu0 0.0
        %419 = vmatprep.subr.mxu0 0.0
        %420 = vmatpush2.msra.mxu0 0.0
        %421 = vmatprep.subr.mxu0 0.0
        %422 = vmatpush2.msra.mxu0 0.0
        %423 = vmatprep.subr.mxu0 0.0
        %424 = vmatpush2.msra.mxu0 0.0
        %425 = vmatprep.subr.mxu0 0.0
        %426 = vmatpush2.msra.mxu0 0.0
        %427 = vmatprep.subr.mxu0 0.0
        %428 = vmatpush2.msra.mxu0 0.0
        %429 = vmatprep.subr.mxu0 0.0
        %430 = vmatpush2.msra.mxu0 0.0
        %431 = vmatprep.subr.mxu0 0.0
        %432 = vmatpush2.msra.mxu0 0.0
        %433 = vmatprep.subr.mxu0 0.0
        %434 = vmatpush2.msra.mxu0 0.0
        %435 = vmatprep.subr.mxu0 0.0
        %436 = vmatpush2.msra.mxu0 0.0
        %437 = vmatprep.subr.mxu0 0.0
        %438 = vmatpush2.msra.mxu0 0.0
        %439 = vmatprep.subr.mxu0 0.0
        %440 = vmatpush2.msra.mxu0 0.0
        %441 = vmatprep.mubr.f32.mxu0 0.0
        %442 = vmatmul.mubr.f32.gmra.mxu0 %v375
        %v443 = vpop.f32.mrf.mxu0
        %v444 = vadd.f32 %v371, %v443
        %v445 = vpop.f32.mrf.mxu0
        %v446 = vadd.f32 %v371, %v445
        %447 = vdwg.mxu0
        %vm448 = vcmp.gt.f32.partialorder %v444, 0.0
        %vm449 = vcmp.gt.f32.partialorder %v446, 0.0
        %v450 = vmul.f32 %v444, 0.01
        %v451 = vmul.f32 %v446, 0.01
        %v452 = vsel %vm448, %v444, %v450
        %v453 = vsel %vm449, %v446, %v451
        %v454 = vadd.f32 %v452, %v356
        %v455 = vadd.f32 %v453, %v358
        %456 = vst [vmem:[%s242] sm:$0xff] %v454
        %457 = vst [vmem:[%s242 + $0x8] sm:$0xff] %v455
        %s458 = sand.u32 %s153, 1
        %s459 = scalar_lea.sflag [#allocation3], %s458
        %s460 = sand.u32 %s153, 1
        %s461 = smul.addr %s460, 16
        %s462 = scalar_lea.vmem [#allocation2], %s461
        // Predicated region
        $region41: #{tpu_custom_call.1} parent=39 // pred_check
          %p463 = pneg %p163
        $region42: #{tpu_custom_call.1} parent=39 // pred_check_branch
          %465 = sbr.rel (%p463) target = $region44
        $region43: #{tpu_custom_call.1} parent=39 // pred_region
          %s466 = smul.u32 2, %s24
          %s468 = ssub.s32 256, 256
          %469 = vsyncadd %s459, %s468
          %s470 = smul.addr %s23, 2
          %s471 = sadd.s32 %s466, %s470
          %s472 = smul.addr %s471, 128
          %s473 = scalar_lea.hbm %s5, %s472
          %s475 = sshll.u32 %s462, 4
          %s476 = int_to_ptr.vmem [resolvable:$true] %s475
          %478 = dma.vmem_to_hbm [thread:$0]  %s476, 256, %s473, %s459
        $region44: #{tpu_custom_call.1} parent=39 // pred_fallthru
          _
      $region40: #{tpu_custom_call.1} parent=5 // pred_fallthru
        _
      %p479 = scmp.le.s32.totalorder 2, %s14
      // Predicated region
      $region45: #{tpu_custom_call.1} parent=5 // pred_check
        %p480 = pneg %p479
      $region46: #{tpu_custom_call.1} parent=5 // pred_check_branch
        %482 = sbr.rel (%p480) target = $region48
      $region47: #{tpu_custom_call.1} parent=5 // pred_region
        %s483 = ssub.s32 %s14, 2
        // Predicated region
        $region49: #{tpu_custom_call.1} parent=47 // pred_check
          %p484 = pneg %p169
        $region50: #{tpu_custom_call.1} parent=47 // pred_check_branch
          %486 = sbr.rel (%p484) target = $region52
        $region51: #{tpu_custom_call.1} parent=47 // pred_region
          %s487 = sand.u32 %s154, 1
          %s488 = scalar_lea.sflag [#allocation3], %s487
          %s489 = sand.u32 %s154, 1
          %s490 = smul.addr %s489, 16
          %s491 = scalar_lea.vmem [#allocation2], %s490
          %492 = dma.done %s488, 256
        $region52: #{tpu_custom_call.1} parent=47 // pred_fallthru
          _
      $region48: #{tpu_custom_call.1} parent=5 // pred_fallthru
        _
    $region6: #{tpu_custom_call.1} parent=1 // loop_footer
      %s18 = sadd.s32 1, %s14
    $region7: #{tpu_custom_call.1} parent=1 // loop_footer_branch
      %13 = sbr.rel target = $region3
    $region8: #{tpu_custom_call.1} parent=1 // loop_exit
      _
    %493 = vsyncpa [#allocation3], 1
    %s494 = scalar_lea.sflag [#allocation3], 1
    %495 = vsyncpa %s494, 1

</llo_original>
